<compile_context>
chip_gen: v7x
topology: tpu7x:2x2x1
jax: 0.10.0
libtpu: 0.0.40
codegen_flags: <defaults>
</compile_context>

<pallas_src>
import functools

import jax
import jax.numpy as jnp
from jax import lax
from jax.experimental import pallas as pl
from jax.experimental.pallas import tpu as pltpu


def _round_up(x: int, m: int) -> int:
    return ((x + m - 1) // m) * m


def _link_sign_loss_kernel(idx_ref, sign_ref, weight_ref, zt_ref, out_ref, *,
                           ec: int, mm_dtype):
    """One edge-chunk grid step: transposed one-hot gather, per-edge dot,
    logsigmoid, per-edge weighted loss terms (lane-dense)."""
    zt = zt_ref[...]                       # (D_pad, N_pad) mm_dtype, VMEM-resident
    n_pad = zt.shape[1]

    idx = idx_ref[0]                       # (1, 2*ec) int32, lane-dense endpoints
    # Transposed one-hot: onehot[n, e] = (n == idx[e]); the idx broadcast along
    # sublanes is a cheap splat.  Out-of-range indices gather an all-zero row
    # (PyTorch would raise); indices are assumed valid.
    onehot = (lax.broadcasted_iota(jnp.int32, (n_pad, 2 * ec), 0) == idx
              ).astype(mm_dtype)

    # ONE MXU contraction per chunk: (D_pad, N_pad) @ (N_pad, 2*ec), f32 acc.
    gathered = jnp.dot(zt, onehot, preferred_element_type=jnp.float32)

    # Per-edge inner product via a sublane reduce over D -> lane-dense (1, ec).
    prod = jnp.sum(gathered[:, :ec] * gathered[:, ec:], axis=0, keepdims=True)

    # sign: +1 (pos edge), -1 (neg edge), 0 (padding).
    x = sign_ref[0] * prod
    # Numerically stable logsigmoid(x) = min(x, 0) - log1p(exp(-|x|)).
    logsig = jnp.minimum(x, 0.0) - jnp.log1p(jnp.exp(-jnp.abs(x)))
    # weight: 1 (pos), C (neg), 0 (padding) -> padding contributes exactly 0.
    out_ref[0] = weight_ref[0] * (-logsig)


def link_sign_product_loss(z, pos_edge_index, neg_edge_index, *,
                           edge_chunk: int = 2048,
                           mm_dtype=jnp.bfloat16):
    """Pallas TPU implementation of Link_Sign_Product_Loss.forward."""
    z = jnp.asarray(z, dtype=jnp.float32)
    pos_edge_index = jnp.asarray(pos_edge_index, dtype=jnp.int32)
    neg_edge_index = jnp.asarray(neg_edge_index, dtype=jnp.int32)

    n_nodes, d = z.shape
    n_pos = pos_edge_index.shape[1]
    n_neg = neg_edge_index.shape[1]
    c = float(n_pos) / float(n_neg)        # static; matches PyTorch (errors if n_neg==0)

    assert edge_chunk % 128 == 0, "edge_chunk must be lane-aligned (multiple of 128)"
    e_total = n_pos + n_neg
    ec = min(edge_chunk, _round_up(e_total, 128))   # lane-aligned chunk size
    num_chunks = -(-e_total // ec)
    t = num_chunks * ec
    pad = t - e_total

    # Pad node/feature dims for clean MXU / lane tiles; zero rows/cols are inert.
    # (256 along N slightly improves v6e/v7x MXU K-fill for medium graphs; 128
    # keeps the one-hot smaller and is correct everywhere.)
    n_pad = _round_up(n_nodes, 128)
    d_pad = _round_up(d, 8)
    zt = jnp.pad(z.T, ((0, d_pad - d), (0, n_pad - n_nodes))).astype(mm_dtype)

    src = jnp.concatenate([pos_edge_index[0], neg_edge_index[0]])
    dst = jnp.concatenate([pos_edge_index[1], neg_edge_index[1]])
    sign = jnp.concatenate([jnp.ones((n_pos,), jnp.float32),
                            -jnp.ones((n_neg,), jnp.float32)])
    weight = jnp.concatenate([jnp.ones((n_pos,), jnp.float32),
                              jnp.full((n_neg,), c, jnp.float32)])

    # Pad to whole chunks; padded indices point at node 0 (valid), weight 0.
    src = jnp.pad(src, (0, pad))
    dst = jnp.pad(dst, (0, pad))
    sign = jnp.pad(sign, (0, pad))
    weight = jnp.pad(weight, (0, pad))

    # Pack per-chunk [src ; dst] lane-dense: (num_chunks, 1, 2*ec).
    idx_packed = jnp.concatenate(
        [src.reshape(num_chunks, 1, ec), dst.reshape(num_chunks, 1, ec)], axis=2)
    sign = sign.reshape(num_chunks, 1, ec)
    weight = weight.reshape(num_chunks, 1, ec)

    # Explicit VMEM budget (keeps v5e's 16 MiB default and v7x's 64 MiB
    # physical scoped-VMEM envelopes honest; the one-hot path is for small N).
    mm_bytes = jnp.dtype(mm_dtype).itemsize
    est = (2 * d_pad * n_pad * mm_bytes          # z^T (double-buffered by pipeline)
           + 2 * (2 * ec + 3 * ec) * 4           # idx/sign/weight/out blocks, x2 bufs
           + n_pad * 2 * ec * (4 + mm_bytes)     # iota + one-hot intermediates
           + d_pad * 2 * ec * 4                  # gathered (f32)
           + 16 * ec * 4)                        # small (1, ec) temporaries
    vmem_limit = int(min(64 * 1024 * 1024, max(16 * 1024 * 1024, 2 * est)))

    kernel = functools.partial(_link_sign_loss_kernel, ec=ec, mm_dtype=mm_dtype)

    per_edge = pl.pallas_call(
        kernel,
        out_shape=jax.ShapeDtypeStruct((num_chunks, 1, ec), jnp.float32),
        grid=(num_chunks,),
        in_specs=[
            pl.BlockSpec((1, 1, 2 * ec), lambda i: (i, 0, 0)),   # packed edge indices
            pl.BlockSpec((1, 1, ec), lambda i: (i, 0, 0)),       # per-edge sign
            pl.BlockSpec((1, 1, ec), lambda i: (i, 0, 0)),       # per-edge weight (C folded)
            pl.BlockSpec((d_pad, n_pad), lambda i: (0, 0)),      # z^T: loads once, resident
        ],
        out_specs=pl.BlockSpec((1, 1, ec), lambda i: (i, 0, 0)), # lane-dense partials
        compiler_params=pltpu.CompilerParams(
            dimension_semantics=("parallel",),   # chunks independent -> megacore-friendly
            vmem_limit_bytes=vmem_limit,
        ),
    )(idx_packed, sign, weight, zt)

    # Final reduction outside the kernel (tiny array); padding contributes 0.
    return jnp.sum(per_edge)


def _reference(z, pos_edge_index, neg_edge_index):
    # Plain-JAX reference mirroring the PyTorch module exactly (f32).
    z_11 = z[pos_edge_index[0], :]
    z_12 = z[pos_edge_index[1], :]
    z_21 = z[neg_edge_index[0], :]
    z_22 = z[neg_edge_index[1], :]
    product1 = jnp.einsum("ij,ij->i", z_11, z_12)
    product2 = jnp.einsum("ij,ij->i", z_21, z_22)
    loss_pos = -jnp.sum(jax.nn.log_sigmoid(product1))
    loss_neg = -jnp.sum(jax.nn.log_sigmoid(-product2))
    C = pos_edge_index.shape[1] / neg_edge_index.shape[1]
    return loss_pos + loss_neg * C


if __name__ == "__main__":
    key = jax.random.PRNGKey(0)
    k_z, k_pos, k_neg = jax.random.split(key, 3)

    num_nodes, hidden = 32, 32
    n_pos_edges, n_neg_edges = 12, 8

    z = jax.random.normal(k_z, (num_nodes, hidden), dtype=jnp.float32)
    pos_edge_index = jax.random.randint(
        k_pos, (2, n_pos_edges), 0, num_nodes, dtype=jnp.int32)
    neg_edge_index = jax.random.randint(
        k_neg, (2, n_neg_edges), 0, num_nodes, dtype=jnp.int32)

    ref = _reference(z, pos_edge_index, neg_edge_index)

    # f32 MXU path: exact one-hot gather -> tight tolerance.
    loss_f32 = jax.block_until_ready(
        link_sign_product_loss(z, pos_edge_index, neg_edge_index,
                               mm_dtype=jnp.float32))
    assert jnp.allclose(loss_f32, ref, rtol=1e-4, atol=1e-4), (loss_f32, ref)

    # bf16 MXU path (default): z rounded to bf16 for the gather, f32 accumulation.
    loss_bf16 = jax.block_until_ready(
        link_sign_product_loss(z, pos_edge_index, neg_edge_index,
                               mm_dtype=jnp.bfloat16))
    assert jnp.allclose(loss_bf16, ref, rtol=2e-2, atol=5e-1), (loss_bf16, ref)

    print("KERNEL_OK")
</pallas_src>

<mosaic_0001>
module attributes {stable_mosaic.version = 11 : i64} {
  func.func @_link_sign_loss_kernel(%arg0: i32, %arg1: memref<1x1x256xi32, #tpu.memory_space<vmem>>, %arg2: memref<1x1x128xf32, #tpu.memory_space<vmem>>, %arg3: memref<1x1x128xf32, #tpu.memory_space<vmem>>, %arg4: memref<32x128xf32, #tpu.memory_space<vmem>>, %arg5: memref<1x1x128xf32, #tpu.memory_space<vmem>>) attributes {dimension_semantics = [#tpu.dimension_semantics<parallel>], iteration_bounds = array<i64: 1>, scalar_prefetch = 0 : i64, scratch_operands = 0 : i64, tpu.core_type = #tpu.core_type<tc>, window_params = [{transform_indices = @transform_0, window_bounds = array<i64: 1, 1, 256>}, {transform_indices = @transform_1, window_bounds = array<i64: 1, 1, 128>}, {transform_indices = @transform_2, window_bounds = array<i64: 1, 1, 128>}, {pipeline_mode = #tpu.pipeline_mode<synchronous>, transform_indices = @transform_3, window_bounds = array<i64: 32, 128>}, {transform_indices = @transform_4, window_bounds = array<i64: 1, 1, 128>}]} {
    %c0 = arith.constant 0 : index
    %c0_0 = arith.constant 0 : index
    %0 = vector.load %arg4[%c0, %c0_0] : memref<32x128xf32, #tpu.memory_space<vmem>>, vector<32x128xf32>
    %c0_1 = arith.constant 0 : index
    %c0_2 = arith.constant 0 : index
    %c0_3 = arith.constant 0 : index
    %1 = vector.load %arg1[%c0_1, %c0_2, %c0_3] : memref<1x1x256xi32, #tpu.memory_space<vmem>>, vector<1x1x256xi32>
    %2 = vector.shape_cast %1 : vector<1x1x256xi32> to vector<1x256xi32>
    %3 = tpu.iota {dimensions = array<i32: 0>} : vector<128x256xi32>
    %4 = vector.broadcast %2 : vector<1x256xi32> to vector<128x256xi32>
    %5 = arith.cmpi eq, %3, %4 : vector<128x256xi32>
    %6 = arith.extui %5 : vector<128x256xi1> to vector<128x256xi32>
    %7 = arith.sitofp %6 : vector<128x256xi32> to vector<128x256xf32>
    %cst = arith.constant dense<0.000000e+00> : vector<32x256xf32>
    %8 = tpu.matmul %0, %7, %cst {dimension_numbers = #tpu.dot_dimension_numbers<[1], [0], [0], [1], [0, 0, 1, 1], [], []>} : vector<32x128xf32>, vector<128x256xf32>, vector<32x256xf32> -> vector<32x256xf32>
    %9 = vector.extract_strided_slice %8 {offsets = [0, 0], sizes = [32, 128], strides = [1, 1]} : vector<32x256xf32> to vector<32x128xf32>
    %10 = vector.extract_strided_slice %8 {offsets = [0, 128], sizes = [32, 128], strides = [1, 1]} : vector<32x256xf32> to vector<32x128xf32>
    %11 = arith.mulf %9, %10 : vector<32x128xf32>
    %cst_4 = arith.constant dense<0.000000e+00> : vector<128xf32>
    %12 = vector.multi_reduction <add>, %11, %cst_4 [0] : vector<32x128xf32> to vector<128xf32>
    %13 = vector.shape_cast %12 : vector<128xf32> to vector<1x128xf32>
    %c0_5 = arith.constant 0 : index
    %c0_6 = arith.constant 0 : index
    %c0_7 = arith.constant 0 : index
    %14 = vector.load %arg2[%c0_5, %c0_6, %c0_7] : memref<1x1x128xf32, #tpu.memory_space<vmem>>, vector<1x1x128xf32>
    %15 = vector.shape_cast %14 : vector<1x1x128xf32> to vector<1x128xf32>
    %16 = arith.mulf %15, %13 : vector<1x128xf32>
    %cst_8 = arith.constant 0.000000e+00 : f32
    %17 = vector.broadcast %cst_8 : f32 to vector<1x128xf32>
    %18 = arith.minimumf %16, %17 : vector<1x128xf32>
    %19 = math.absf %16 : vector<1x128xf32>
    %cst_9 = arith.constant 0.000000e+00 : f32
    %20 = vector.broadcast %cst_9 : f32 to vector<1x128xf32>
    %21 = arith.subf %20, %19 : vector<1x128xf32>
    %22 = math.exp %21 : vector<1x128xf32>
    %23 = math.log1p %22 : vector<1x128xf32>
    %24 = arith.subf %18, %23 : vector<1x128xf32>
    %c0_10 = arith.constant 0 : index
    %c0_11 = arith.constant 0 : index
    %c0_12 = arith.constant 0 : index
    %25 = vector.load %arg3[%c0_10, %c0_11, %c0_12] : memref<1x1x128xf32, #tpu.memory_space<vmem>>, vector<1x1x128xf32>
    %26 = vector.shape_cast %25 : vector<1x1x128xf32> to vector<1x128xf32>
    %cst_13 = arith.constant 0.000000e+00 : f32
    %27 = vector.broadcast %cst_13 : f32 to vector<1x128xf32>
    %28 = arith.subf %27, %24 : vector<1x128xf32>
    %29 = arith.mulf %26, %28 : vector<1x128xf32>
    %c0_14 = arith.constant 0 : index
    %c0_15 = arith.constant 0 : index
    %c0_16 = arith.constant 0 : index
    %30 = vector.load %arg5[%c0_14, %c0_15, %c0_16] : memref<1x1x128xf32, #tpu.memory_space<vmem>>, vector<1x1x128xf32>
    %31 = vector.shape_cast %30 : vector<1x1x128xf32> to vector<1x128xf32>
    %32 = vector.shape_cast %29 : vector<1x128xf32> to vector<1x1x128xf32>
    tpu.vector_store %arg5[%c0_14, %c0_15, %c0_16], %32 {strides = array<i32>} : memref<1x1x128xf32, #tpu.memory_space<vmem>>, vector<1x1x128xf32>,
    return
  }
  func.func @transform_0(%arg0: i32) -> (i32, i32, i32) {
    %c0_i32 = arith.constant 0 : i32
    %c0_i32_0 = arith.constant 0 : i32
    %c0_i32_1 = arith.constant 0 : i32
    return %arg0, %c0_i32, %c0_i32_0 : i32, i32, i32
  }
  func.func @transform_1(%arg0: i32) -> (i32, i32, i32) {
    %c0_i32 = arith.constant 0 : i32
    %c0_i32_0 = arith.constant 0 : i32
    %c0_i32_1 = arith.constant 0 : i32
    return %arg0, %c0_i32, %c0_i32_0 : i32, i32, i32
  }
  func.func @transform_2(%arg0: i32) -> (i32, i32, i32) {
    %c0_i32 = arith.constant 0 : i32
    %c0_i32_0 = arith.constant 0 : i32
    %c0_i32_1 = arith.constant 0 : i32
    return %arg0, %c0_i32, %c0_i32_0 : i32, i32, i32
  }
  func.func @transform_3(%arg0: i32) -> (i32, i32) {
    %c0_i32 = arith.constant 0 : i32
    %c0_i32_0 = arith.constant 0 : i32
    %c0_i32_1 = arith.constant 0 : i32
    return %c0_i32, %c0_i32_0 : i32, i32
  }
  func.func @transform_4(%arg0: i32) -> (i32, i32, i32) {
    %c0_i32 = arith.constant 0 : i32
    %c0_i32_0 = arith.constant 0 : i32
    %c0_i32_1 = arith.constant 0 : i32
    return %arg0, %c0_i32, %c0_i32_0 : i32, i32, i32
  }
}

</mosaic_0001>

<llo_original>
// kernel: tpu_custom_call.1
$region0: #{tpu_custom_call.1}
  #allocation0 [shape = 'u32[]', space=smem, size = 0x4, offset = 0x4, fixed_abs, tag = 'smem constant byte address 0x4 - core index']
  #allocation1 [shape = 'u32[144,128]{1,0:T(1,128)}', space=vmem, size = 0x12000, scoped, tag = 'internal scratch']
  %s0 = inlined_call_operand.hbm [shape: s32[1,1,256], index: 0, kind: input, shape index: {}]
  %s1 = inlined_call_operand.vmem [shape: f32[1,1,128], index: 1, kind: input, shape index: {}]
  %s2 = inlined_call_operand.vmem [shape: f32[1,1,128], index: 2, kind: input, shape index: {}]
  %s3 = inlined_call_operand.hbm [shape: f32[32,128], index: 3, kind: input, shape index: {}]
  %s4 = inlined_call_operand.hbm [shape: f32[1,1,128], index: 4, kind: output, shape index: {}]
  %s5 = sld [smem:[#allocation0]]
  $region34: #{tpu_custom_call.1} parent=0
    _
  %s7 = ssub.s32 1, %s5
  %s8 = scalar_select 0, %s7, %s5
  $region1: #{tpu_custom_call.1} parent=0
    #allocation2 [shape = 'u8[1024]{0}', space=vmem, size = 0x400, scoped, tag = 'input window, operand 0, single buffered']
    #allocation3 [shape = 's32[1]{0}', space=sflag, size = 0x4, scoped, tag = 'scoped memory for tpu_custom_call.1']
    #allocation4 [shape = 's32[1]{0}', space=sflag, size = 0x4, scoped, tag = 'scoped memory for tpu_custom_call.1']
    #allocation5 [shape = 'u8[16384]{0}', space=vmem, size = 0x4000, scoped, tag = 'input window, operand 3, single buffered']
    #allocation6 [shape = 's32[1]{0}', space=sflag, size = 0x4, scoped, tag = 'scoped memory for tpu_custom_call.1']
    #allocation7 [shape = 'u8[512]{0}', space=vmem, size = 0x400, scoped, tag = 'output window, operand 0, single buffered']
    %9 = vsyncpa [#allocation3], 0
    %10 = vsyncpa [#allocation6], 0
    %11 = vsyncpa [#allocation4], 0
    // Predicated region
    $region2: #{tpu_custom_call.1} parent=1 // pred_check
      _
    $region3: #{tpu_custom_call.1} parent=1 // pred_check_branch
      %13 = sbr.rel (0) target = $region5
    $region4: #{tpu_custom_call.1} parent=1 // pred_region
      %s15 = ssub.s32 32, 32
      %16 = vsyncadd [#allocation3], %s15
      %s18 = sshll.u32 [#allocation2], 4
      %s19 = int_to_ptr.vmem [resolvable:$true] %s18
      %21 = dma.hbm_to_vmem [thread:$0]  %s0, 32, %s19, [#allocation3]
    $region5: #{tpu_custom_call.1} parent=1 // pred_fallthru
      _
    // Predicated region
    $region6: #{tpu_custom_call.1} parent=1 // pred_check
      _
    $region7: #{tpu_custom_call.1} parent=1 // pred_check_branch
      %23 = sbr.rel (0) target = $region9
    $region8: #{tpu_custom_call.1} parent=1 // pred_region
      _
    $region9: #{tpu_custom_call.1} parent=1 // pred_fallthru
      _
    // Predicated region
    $region10: #{tpu_custom_call.1} parent=1 // pred_check
      _
    $region11: #{tpu_custom_call.1} parent=1 // pred_check_branch
      %25 = sbr.rel (0) target = $region13
    $region12: #{tpu_custom_call.1} parent=1 // pred_region
      _
    $region13: #{tpu_custom_call.1} parent=1 // pred_fallthru
      _
    // Predicated region
    $region14: #{tpu_custom_call.1} parent=1 // pred_check
      _
    $region15: #{tpu_custom_call.1} parent=1 // pred_check_branch
      %27 = sbr.rel (0) target = $region17
    $region16: #{tpu_custom_call.1} parent=1 // pred_region
      %s29 = ssub.s32 512, 512
      %30 = vsyncadd [#allocation6], %s29
      %s31 = sshll.u32 [#allocation5], 4
      %s32 = int_to_ptr.vmem [resolvable:$true] %s31
      %37 = dma.hbm_to_vmem [thread:$0]  %s3, 512, %s32, [#allocation6], 128, 128, 8
    $region17: #{tpu_custom_call.1} parent=1 // pred_fallthru
      _
    // Predicated region
    $region18: #{tpu_custom_call.1} parent=1 // pred_check
      _
    $region19: #{tpu_custom_call.1} parent=1 // pred_check_branch
      %39 = sbr.rel (0) target = $region21
    $region20: #{tpu_custom_call.1} parent=1 // pred_region
      %40 = dma.done [#allocation3], 32
    $region21: #{tpu_custom_call.1} parent=1 // pred_fallthru
      _
    // Predicated region
    $region22: #{tpu_custom_call.1} parent=1 // pred_check
      _
    $region23: #{tpu_custom_call.1} parent=1 // pred_check_branch
      %42 = sbr.rel (0) target = $region25
    $region24: #{tpu_custom_call.1} parent=1 // pred_region
      %43 = dma.done [#allocation6], 512
    $region25: #{tpu_custom_call.1} parent=1 // pred_fallthru
      _
    %v44 = vld [vmem:[#allocation5] sm:$0xff]
    %v45 = vld [vmem:[#allocation5 + $0x8] sm:$0xff]
    %v46 = vld [vmem:[#allocation5 + $0x10] sm:$0xff]
    %v47 = vld [vmem:[#allocation5 + $0x18] sm:$0xff]
    %v48 = vld [vmem:[#allocation2] sm:$0x3]
    %v49 = vlaneseq
    %v50 = vshrl.u32 %v49, 7
    %v51 = vadd.s32 %v50, 8
    %v52 = vadd.s32 %v50, 16
    %v53 = vadd.s32 %v50, 24
    %v54 = vadd.s32 %v50, 32
    %v55 = vadd.s32 %v50, 40
    %v56 = vadd.s32 %v50, 48
    %v57 = vadd.s32 %v50, 56
    %v58 = vadd.s32 %v50, 64
    %v59 = vadd.s32 %v50, 72
    %v60 = vadd.s32 %v50, 80
    %v61 = vadd.s32 %v50, 88
    %v62 = vadd.s32 %v50, 96
    %v63 = vadd.s32 %v50, 104
    %v64 = vadd.s32 %v50, 112
    %v65 = vadd.s32 %v50, 120
    %v66 = vlaneseq
    %v67 = vshrl.u32 %v66, 7
    %v68 = vsub.s32 0, %v67
    %v69 = vrot.slane %v48, %v68
    %v70 = vlaneseq
    %v71 = vshrl.u32 %v70, 7
    %v72 = vsub.s32 1, %v71
    %v73 = vrot.slane %v48, %v72
    %vm74 = vcmp.eq.s32.totalorder %v50, %v69
    %vm75 = vcmp.eq.s32.totalorder %v50, %v73
    %vm76 = vcmp.eq.s32.totalorder %v51, %v69
    %vm77 = vcmp.eq.s32.totalorder %v51, %v73
    %vm78 = vcmp.eq.s32.totalorder %v52, %v69
    %vm79 = vcmp.eq.s32.totalorder %v52, %v73
    %vm80 = vcmp.eq.s32.totalorder %v53, %v69
    %vm81 = vcmp.eq.s32.totalorder %v53, %v73
    %vm82 = vcmp.eq.s32.totalorder %v54, %v69
    %vm83 = vcmp.eq.s32.totalorder %v54, %v73
    %vm84 = vcmp.eq.s32.totalorder %v55, %v69
    %vm85 = vcmp.eq.s32.totalorder %v55, %v73
    %vm86 = vcmp.eq.s32.totalorder %v56, %v69
    %vm87 = vcmp.eq.s32.totalorder %v56, %v73
    %vm88 = vcmp.eq.s32.totalorder %v57, %v69
    %vm89 = vcmp.eq.s32.totalorder %v57, %v73
    %vm90 = vcmp.eq.s32.totalorder %v58, %v69
    %vm91 = vcmp.eq.s32.totalorder %v58, %v73
    %vm92 = vcmp.eq.s32.totalorder %v59, %v69
    %vm93 = vcmp.eq.s32.totalorder %v59, %v73
    %vm94 = vcmp.eq.s32.totalorder %v60, %v69
    %vm95 = vcmp.eq.s32.totalorder %v60, %v73
    %vm96 = vcmp.eq.s32.totalorder %v61, %v69
    %vm97 = vcmp.eq.s32.totalorder %v61, %v73
    %vm98 = vcmp.eq.s32.totalorder %v62, %v69
    %vm99 = vcmp.eq.s32.totalorder %v62, %v73
    %vm100 = vcmp.eq.s32.totalorder %v63, %v69
    %vm101 = vcmp.eq.s32.totalorder %v63, %v73
    %vm102 = vcmp.eq.s32.totalorder %v64, %v69
    %vm103 = vcmp.eq.s32.totalorder %v64, %v73
    %vm104 = vcmp.eq.s32.totalorder %v65, %v69
    %vm105 = vcmp.eq.s32.totalorder %v65, %v73
    %v106 = vsel %vm74, 1, 0
    %v107 = vsel %vm75, 1, 0
    %v108 = vsel %vm76, 1, 0
    %v109 = vsel %vm77, 1, 0
    %v110 = vsel %vm78, 1, 0
    %v111 = vsel %vm79, 1, 0
    %v112 = vsel %vm80, 1, 0
    %v113 = vsel %vm81, 1, 0
    %v114 = vsel %vm82, 1, 0
    %v115 = vsel %vm83, 1, 0
    %v116 = vsel %vm84, 1, 0
    %v117 = vsel %vm85, 1, 0
    %v118 = vsel %vm86, 1, 0
    %v119 = vsel %vm87, 1, 0
    %v120 = vsel %vm88, 1, 0
    %v121 = vsel %vm89, 1, 0
    %v122 = vsel %vm90, 1, 0
    %v123 = vsel %vm91, 1, 0
    %v124 = vsel %vm92, 1, 0
    %v125 = vsel %vm93, 1, 0
    %v126 = vsel %vm94, 1, 0
    %v127 = vsel %vm95, 1, 0
    %v128 = vsel %vm96, 1, 0
    %v129 = vsel %vm97, 1, 0
    %v130 = vsel %vm98, 1, 0
    %v131 = vsel %vm99, 1, 0
    %v132 = vsel %vm100, 1, 0
    %v133 = vsel %vm101, 1, 0
    %v134 = vsel %vm102, 1, 0
    %v135 = vsel %vm103, 1, 0
    %v136 = vsel %vm104, 1, 0
    %v137 = vsel %vm105, 1, 0
    %v138 = vcvt.s32.f32 %v106
    %v139 = vcvt.s32.f32 %v107
    %v140 = vcvt.s32.f32 %v108
    %v141 = vcvt.s32.f32 %v109
    %v142 = vcvt.s32.f32 %v110
    %v143 = vcvt.s32.f32 %v111
    %v144 = vcvt.s32.f32 %v112
    %v145 = vcvt.s32.f32 %v113
    %v146 = vcvt.s32.f32 %v114
    %v147 = vcvt.s32.f32 %v115
    %v148 = vcvt.s32.f32 %v116
    %v149 = vcvt.s32.f32 %v117
    %v150 = vcvt.s32.f32 %v118
    %v151 = vcvt.s32.f32 %v119
    %v152 = vcvt.s32.f32 %v120
    %v153 = vcvt.s32.f32 %v121
    %v154 = vcvt.s32.f32 %v122
    %v155 = vcvt.s32.f32 %v123
    %v156 = vcvt.s32.f32 %v124
    %v157 = vcvt.s32.f32 %v125
    %v158 = vcvt.s32.f32 %v126
    %v159 = vcvt.s32.f32 %v127
    %v160 = vcvt.s32.f32 %v128
    %v161 = vcvt.s32.f32 %v129
    %v162 = vcvt.s32.f32 %v130
    %v163 = vcvt.s32.f32 %v131
    %v164 = vcvt.s32.f32 %v132
    %v165 = vcvt.s32.f32 %v133
    %v166 = vcvt.s32.f32 %v134
    %v167 = vcvt.s32.f32 %v135
    %v168 = vcvt.s32.f32 %v136
    %v169 = vcvt.s32.f32 %v137
    %170 = vmatprep.subr.mxu0 %v139
    %171 = vmatpush1.msra.mxu0 %v138
    %172 = vmatprep.subr.mxu0 %v141
    %173 = vmatpush1.msra.mxu0 %v140
    %174 = vmatprep.subr.mxu0 %v143
    %175 = vmatpush1.msra.mxu0 %v142
    %176 = vmatprep.subr.mxu0 %v145
    %177 = vmatpush1.msra.mxu0 %v144
    %178 = vmatprep.subr.mxu0 %v147
    %179 = vmatpush1.msra.mxu0 %v146
    %180 = vmatprep.subr.mxu0 %v149
    %181 = vmatpush1.msra.mxu0 %v148
    %182 = vmatprep.subr.mxu0 %v151
    %183 = vmatpush1.msra.mxu0 %v150
    %184 = vmatprep.subr.mxu0 %v153
    %185 = vmatpush1.msra.mxu0 %v152
    %186 = vmatprep.subr.mxu0 %v155
    %187 = vmatpush1.msra.mxu0 %v154
    %188 = vmatprep.subr.mxu0 %v157
    %189 = vmatpush1.msra.mxu0 %v156
    %190 = vmatprep.subr.mxu0 %v159
    %191 = vmatpush1.msra.mxu0 %v158
    %192 = vmatprep.subr.mxu0 %v161
    %193 = vmatpush1.msra.mxu0 %v160
    %194 = vmatprep.subr.mxu0 %v163
    %195 = vmatpush1.msra.mxu0 %v162
    %196 = vmatprep.subr.mxu0 %v165
    %197 = vmatpush1.msra.mxu0 %v164
    %198 = vmatprep.subr.mxu0 %v167
    %199 = vmatpush1.msra.mxu0 %v166
    %200 = vmatprep.subr.mxu0 %v169
    %201 = vmatpush1.msra.mxu0 %v168
    %202 = vmatprep.subr.mxu0 0.0
    %203 = vmatpush1.msra.mxu0 0.0
    %204 = vmatprep.subr.mxu0 0.0
    %205 = vmatpush1.msra.mxu0 0.0
    %206 = vmatprep.subr.mxu0 0.0
    %207 = vmatpush1.msra.mxu0 0.0
    %208 = vmatprep.subr.mxu0 0.0
    %209 = vmatpush1.msra.mxu0 0.0
    %210 = vmatprep.subr.mxu0 0.0
    %211 = vmatpush1.msra.mxu0 0.0
    %212 = vmatprep.subr.mxu0 0.0
    %213 = vmatpush1.msra.mxu0 0.0
    %214 = vmatprep.subr.mxu0 0.0
    %215 = vmatpush1.msra.mxu0 0.0
    %216 = vmatprep.subr.mxu0 0.0
    %217 = vmatpush1.msra.mxu0 0.0
    %218 = vmatprep.subr.mxu0 0.0
    %219 = vmatpush1.msra.mxu0 0.0
    %220 = vmatprep.subr.mxu0 0.0
    %221 = vmatpush1.msra.mxu0 0.0
    %222 = vmatprep.subr.mxu0 0.0
    %223 = vmatpush1.msra.mxu0 0.0
    %224 = vmatprep.subr.mxu0 0.0
    %225 = vmatpush1.msra.mxu0 0.0
    %226 = vmatprep.subr.mxu0 0.0
    %227 = vmatpush1.msra.mxu0 0.0
    %228 = vmatprep.subr.mxu0 0.0
    %229 = vmatpush1.msra.mxu0 0.0
    %230 = vmatprep.subr.mxu0 0.0
    %231 = vmatpush1.msra.mxu0 0.0
    %232 = vmatprep.subr.mxu0 0.0
    %233 = vmatpush1.msra.mxu0 0.0
    %234 = vmatprep.mubr.f32.mxu0 0.0
    %235 = vmatmul.mubr.f32.gmra.mrb[0].mxu0 %v44
    %v236 = vpop.f32.mrb[0].mxu0
    %v237 = vadd.f32 0.0, %v236
    %v238 = vpop.f32.mrb[0].mxu0
    %v239 = vadd.f32 0.0, %v238
    %240 = vmatprep.mubr.f32.mxu0 0.0
    %241 = vmatmul.mubr.f32.gmra.mrb[0].mxu0 %v45
    %v242 = vpop.f32.mrb[0].mxu0
    %v243 = vadd.f32 0.0, %v242
    %v244 = vpop.f32.mrb[0].mxu0
    %v245 = vadd.f32 0.0, %v244
    %246 = vmatprep.mubr.f32.mxu0 0.0
    %247 = vmatmul.mubr.f32.gmra.mrb[0].mxu0 %v46
    %v248 = vpop.f32.mrb[0].mxu0
    %v249 = vadd.f32 0.0, %v248
    %v250 = vpop.f32.mrb[0].mxu0
    %v251 = vadd.f32 0.0, %v250
    %252 = vmatprep.mubr.f32.mxu0 0.0
    %253 = vmatmul.mubr.f32.gmra.mrb[0].mxu0 %v47
    %v254 = vpop.f32.mrb[0].mxu0
    %v255 = vadd.f32 0.0, %v254
    %v256 = vpop.f32.mrb[0].mxu0
    %v257 = vadd.f32 0.0, %v256
    %258 = vdwg.mxu0
    %v259 = vmul.f32 %v237, %v239
    %v260 = vmul.f32 %v243, %v245
    %v261 = vmul.f32 %v249, %v251
    %v262 = vmul.f32 %v255, %v257
    %v263 = vadd.f32 %v259, %v260
    %v264 = vadd.f32 %v263, %v261
    %v265 = vadd.f32 %v264, %v262
    %v266 = vrot.slane %v265, 4
    %v267 = vadd.f32 %v265, %v266
    %v268 = vrot.slane %v267, 2
    %v269 = vadd.f32 %v267, %v268
    %v270 = vrot.slane %v269, 1
    %v271 = vadd.f32 %v269, %v270
    %v272 = vld [vmem:[%s1] sm:$0x1]
    %v273 = vmul.f32 %v272, %v271
    %v274 = vmin.f32 %v273, 0.0
    %v275 = vand.u32 2147483647, %v273
    %v276 = vsub.f32 0.0, %v275
    %v277 = vmul.f32 %v276, 1.442695
    %v278 = vpow.pop %v277
    %v279 = vadd.f32 %v278, 1.0
    %v280 = vlog2.pop %v279
    %v281 = vmul.f32 %v280, 0.6931472
    %v282 = vmul.f32 -0.5, %v278
    %v283 = vadd.f32 %v282, 1.0
    %v284 = vmul.f32 %v283, %v278
    %v285 = vand.u32 2147483647, %v278
    %vm286 = vcmp.lt.f32.partialorder %v285, 0.0004427343
    %v287 = vsel %vm286, %v284, %v281
    %v288 = vsub.f32 %v274, %v287
    %v289 = vld [vmem:[%s2] sm:$0x1]
    %v290 = vsub.f32 0.0, %v288
    %v291 = vmul.f32 %v289, %v290
    %292 = vst [vmem:[#allocation7] sm:$0x1] %v291
    // Predicated region
    $region26: #{tpu_custom_call.1} parent=1 // pred_check
      _
    $region27: #{tpu_custom_call.1} parent=1 // pred_check_branch
      %294 = sbr.rel (0) target = $region29
    $region28: #{tpu_custom_call.1} parent=1 // pred_region
      %s296 = ssub.s32 16, 16
      %297 = vsyncadd [#allocation4], %s296
      %s299 = sshll.u32 [#allocation7], 4
      %s300 = int_to_ptr.vmem [resolvable:$true] %s299
      %302 = dma.vmem_to_hbm [thread:$0]  %s300, 16, %s4, [#allocation4]
    $region29: #{tpu_custom_call.1} parent=1 // pred_fallthru
      _
    // Predicated region
    $region30: #{tpu_custom_call.1} parent=1 // pred_check
      _
    $region31: #{tpu_custom_call.1} parent=1 // pred_check_branch
      %304 = sbr.rel (0) target = $region33
    $region32: #{tpu_custom_call.1} parent=1 // pred_region
      %305 = dma.done [#allocation4], 16
    $region33: #{tpu_custom_call.1} parent=1 // pred_fallthru
      _
    %306 = vsyncpa [#allocation3], 1
    %307 = vsyncpa [#allocation6], 1
    %308 = vsyncpa [#allocation4], 1

</llo_original>
